<compile_context>
chip_gen: v7x
topology: tpu7x:2x2x1
jax: 0.10.0
libtpu: 0.0.40
codegen_flags: <defaults>
</compile_context>

<pallas_src>
import functools

import jax
import jax.numpy as jnp
from jax import lax
from jax.experimental import pallas as pl
from jax.experimental.pallas import tpu as pltpu


def _round_up(x: int, m: int) -> int:
    return ((x + m - 1) // m) * m


def _embed_vmem_kernel(ids_ref, tgt_ref, pos_ref, out_ref, *,
                       seq_pad, seq_tile, unroll):
    # ids_ref : (B*S_pad,) int32 SMEM -- flattened, clamped token ids (prefetch)
    # tgt_ref : (V, D) VMEM           -- whole token table, resident every step
    # pos_ref : (TS, D) VMEM          -- positional rows for this seq tile
    # out_ref : (TS, D) VMEM          -- output tile (batch dim squeezed)
    b = pl.program_id(0)
    st = pl.program_id(1)
    base = b * seq_pad + st * seq_tile

    def gather_row(i, carry):
        tok = ids_ref[base + i]
        out_ref[pl.ds(i, 1), :] = tgt_ref[pl.ds(tok, 1), :].astype(out_ref.dtype)
        return carry

    lax.fori_loop(0, seq_tile, gather_row, None, unroll=unroll)

    # Single vectorized, lane-dense add of the positional slice.
    out_ref[...] = out_ref[...] + pos_ref[...].astype(out_ref.dtype)


def _embed_hbm_kernel(ids_ref, tgt_hbm, pos_ref, out_ref, sem, *,
                      seq_pad, seq_tile, unroll):
    # ids_ref : (B*S_pad,) int32 SMEM -- flattened, clamped token ids (prefetch)
    # tgt_hbm : (V, D) HBM            -- token table (never VMEM-resident)
    # pos_ref : (TS, D) VMEM          -- positional rows for this seq tile
    # out_ref : (TS, D) VMEM          -- output tile; gather lands here directly
    # sem     : DMA semaphore
    b = pl.program_id(0)
    st = pl.program_id(1)
    base = b * seq_pad + st * seq_tile

    # Issue one row-gather DMA per token, landing directly in out_ref.
    def issue(i, carry):
        tok = ids_ref[base + i]
        pltpu.make_async_copy(tgt_hbm.at[pl.ds(tok, 1), :],
                              out_ref.at[pl.ds(i, 1), :],
                              sem).start()
        return carry

    lax.fori_loop(0, seq_tile, issue, None, unroll=unroll)

    # One aggregate wait: the DMA semaphore counts bytes, and the seq_tile
    # identical row copies above total exactly seq_tile * D * itemsize bytes,
    # the same byte count as this full-tile descriptor.
    pltpu.make_async_copy(tgt_hbm.at[pl.ds(0, seq_tile), :], out_ref, sem).wait()

    # Add the positional slice (mem-bound VPU add, lane-dense store).
    out_ref[...] = out_ref[...] + pos_ref[...].astype(out_ref.dtype)


def embedding_forward(x_ids, tgt_w, pos_w, *,
                      max_seq_tile=256,
                      vmem_table_budget_bytes=40 * 1024 * 1024,
                      force_hbm_gather=False,
                      unroll=8):
    """x_ids: (B, S) int; tgt_w: (V, D); pos_w: (P, D) -> (B, S, D)."""
    B, S = x_ids.shape
    V, D = tgt_w.shape
    P, D2 = pos_w.shape
    assert D == D2
    assert S <= P, "seq_len must not exceed max_pos"

    # Seq tile: multiple of 8 (sublane-dense), capped; pad S so tiles divide.
    TS = _round_up(min(S, max_seq_tile), 8)
    S_pad = _round_up(S, TS)
    num_st = S_pad // TS
    assert TS <= V, "seq tile larger than vocab is not supported"

    # Indices live in SMEM via scalar prefetch.  Clamp so out-of-range ids can
    # never trigger an unchecked OOB access (padded tokens gather row 0; their
    # output rows are discarded).
    ids = jnp.clip(x_ids.astype(jnp.int32), 0, V - 1)
    if S_pad != S:
        ids = jnp.pad(ids, ((0, 0), (0, S_pad - S)))
    ids = ids.reshape(B * S_pad)

    # Positional rows actually used, padded to the tiled length (done once,
    # outside the kernel); fetched per-tile by a normal pipelined BlockSpec.
    pos_sliced = pos_w[:S]
    if S_pad != S:
        pos_sliced = jnp.pad(pos_sliced, ((0, S_pad - S), (0, 0)))

    out_dtype = tgt_w.dtype
    table_bytes = V * D * tgt_w.dtype.itemsize
    # Per-tile VMEM (double-buffered pos input + out output tiles).
    tile_bytes = 2 * TS * D * (pos_sliced.dtype.itemsize + jnp.dtype(out_dtype).itemsize)
    # VMEM-resident fast path if the (double-buffered) table + tiles fit a
    # conservative budget (safe on v7x 64 MiB; v5e/v6e callers may raise it).
    use_vmem_table = (not force_hbm_gather) and (2 * table_bytes + tile_bytes) <= vmem_table_budget_bytes

    vmem_need = tile_bytes + (2 * table_bytes if use_vmem_table else 0)
    vmem_limit = None
    if vmem_need > 24 * 1024 * 1024:
        vmem_limit = min(vmem_need + (8 << 20), 100 * 1024 * 1024)

    pos_spec = pl.BlockSpec((TS, D), lambda b, st, *_: (st, 0))
    out_spec = pl.BlockSpec((None, TS, D), lambda b, st, *_: (b, st, 0))

    if use_vmem_table:
        kernel = functools.partial(_embed_vmem_kernel, seq_pad=S_pad,
                                   seq_tile=TS, unroll=min(unroll, TS))
        in_specs = [
            pl.BlockSpec((V, D), lambda b, st, *_: (0, 0)),  # whole table, resident
            pos_spec,
        ]
        scratch_shapes = []
    else:
        kernel = functools.partial(_embed_hbm_kernel, seq_pad=S_pad,
                                   seq_tile=TS, unroll=min(unroll, TS))
        in_specs = [
            pl.BlockSpec(memory_space=pl.ANY),               # table stays in HBM
            pos_spec,
        ]
        scratch_shapes = [pltpu.SemaphoreType.DMA(())]

    out = pl.pallas_call(
        kernel,
        out_shape=jax.ShapeDtypeStruct((B, S_pad, D), out_dtype),
        grid_spec=pltpu.PrefetchScalarGridSpec(
            num_scalar_prefetch=1,
            grid=(B, num_st),
            in_specs=in_specs,
            out_specs=out_spec,
            scratch_shapes=scratch_shapes,
        ),
        compiler_params=pltpu.CompilerParams(
            dimension_semantics=("parallel", "parallel"),
            vmem_limit_bytes=vmem_limit,
        ),
    )(ids, tgt_w, pos_sliced)

    if S_pad != S:
        out = out[:, :S, :]
    return out


if __name__ == "__main__":
    # Small, deterministic configuration (mirrors args of the PyTorch module).
    # d_model=128 keeps the output tile lane-dense on TPU.
    batch, seq_len = 2, 8
    vocab_size, max_pos, d_model = 512, 32, 128
    std_rate = 0.5
    std = float(d_model) ** (-std_rate)

    key = jax.random.PRNGKey(0)
    k_tgt, k_pos, k_ids = jax.random.split(key, 3)

    # init.normal_(mean=0, std=d_model ** -std_rate) equivalent.
    tgt_w = std * jax.random.normal(k_tgt, (vocab_size, d_model), dtype=jnp.float32)
    pos_w = std * jax.random.normal(k_pos, (max_pos, d_model), dtype=jnp.float32)

    x_ids = jax.random.randint(k_ids, (batch, seq_len), 0, vocab_size, dtype=jnp.int32)

    # Pure-JAX reference for the PyTorch forward semantics.
    ref = tgt_w[x_ids] + pos_w[:seq_len][None, :, :]

    # Default path (VMEM-resident token table for this small vocab).
    out = jax.block_until_ready(embedding_forward(x_ids, tgt_w, pos_w))
    assert out.shape == (batch, seq_len, d_model)
    assert jnp.allclose(out, ref, atol=1e-6, rtol=1e-6)

    # Also exercise the large-vocab HBM DMA-gather fallback on the same inputs.
    out_hbm = jax.block_until_ready(
        embedding_forward(x_ids, tgt_w, pos_w, force_hbm_gather=True))
    assert jnp.allclose(out_hbm, ref, atol=1e-6, rtol=1e-6)

    print("KERNEL_OK")
</pallas_src>

<mosaic_0001>
module attributes {stable_mosaic.version = 11 : i64} {
  func.func @_embed_vmem_kernel(%arg0: i32, %arg1: i32, %arg2: memref<16xi32, #tpu.memory_space<smem>>, %arg3: memref<512x128xf32, #tpu.memory_space<vmem>>, %arg4: memref<8x128xf32, #tpu.memory_space<vmem>>, %arg5: memref<1x8x128xf32, #tpu.memory_space<vmem>>) attributes {dimension_semantics = [#tpu.dimension_semantics<parallel>, #tpu.dimension_semantics<parallel>], iteration_bounds = array<i64: 2, 1>, scalar_prefetch = 1 : i64, scratch_operands = 0 : i64, tpu.core_type = #tpu.core_type<tc>, window_params = [{pipeline_mode = #tpu.pipeline_mode<synchronous>, transform_indices = @transform_0, window_bounds = array<i64: 512, 128>}, {transform_indices = @transform_1, window_bounds = array<i64: 8, 128>}, {transform_indices = @transform_2, window_bounds = array<i64: 1, 8, 128>}]} {
    %c8_i32 = arith.constant 8 : i32
    %0 = arith.muli %arg0, %c8_i32 : i32
    %c8_i32_0 = arith.constant 8 : i32
    %1 = arith.muli %arg1, %c8_i32_0 : i32
    %2 = arith.addi %0, %1 : i32
    %c0_i32 = arith.constant 0 : i32
    %3 = arith.addi %2, %c0_i32 : i32
    %4 = arith.index_cast %3 : i32 to index
    %5 = memref.load %arg2[%4] : memref<16xi32, #tpu.memory_space<smem>>
    %6 = arith.index_cast %5 : i32 to index
    %c0 = arith.constant 0 : index
    %7 = vector.load %arg3[%6, %c0] : memref<512x128xf32, #tpu.memory_space<vmem>>, vector<1x128xf32>
    %c0_1 = arith.constant 0 : index
    %8 = arith.index_cast %c0_i32 : i32 to index
    %c0_2 = arith.constant 0 : index
    %9 = vector.load %arg5[%c0_1, %8, %c0_2] : memref<1x8x128xf32, #tpu.memory_space<vmem>>, vector<1x1x128xf32>
    %10 = vector.shape_cast %9 : vector<1x1x128xf32> to vector<1x128xf32>
    %11 = vector.shape_cast %7 : vector<1x128xf32> to vector<1x1x128xf32>
    tpu.vector_store %arg5[%c0_1, %8, %c0_2], %11 {strides = array<i32>} : memref<1x8x128xf32, #tpu.memory_space<vmem>>, vector<1x1x128xf32>,
    %c1_i32 = arith.constant 1 : i32
    %12 = arith.addi %2, %c1_i32 : i32
    %13 = arith.index_cast %12 : i32 to index
    %14 = memref.load %arg2[%13] : memref<16xi32, #tpu.memory_space<smem>>
    %15 = arith.index_cast %14 : i32 to index
    %c0_3 = arith.constant 0 : index
    %16 = vector.load %arg3[%15, %c0_3] : memref<512x128xf32, #tpu.memory_space<vmem>>, vector<1x128xf32>
    %c0_4 = arith.constant 0 : index
    %17 = arith.index_cast %c1_i32 : i32 to index
    %c0_5 = arith.constant 0 : index
    %18 = vector.load %arg5[%c0_4, %17, %c0_5] : memref<1x8x128xf32, #tpu.memory_space<vmem>>, vector<1x1x128xf32>
    %19 = vector.shape_cast %18 : vector<1x1x128xf32> to vector<1x128xf32>
    %20 = vector.shape_cast %16 : vector<1x128xf32> to vector<1x1x128xf32>
    tpu.vector_store %arg5[%c0_4, %17, %c0_5], %20 {strides = array<i32>} : memref<1x8x128xf32, #tpu.memory_space<vmem>>, vector<1x1x128xf32>,
    %c2_i32 = arith.constant 2 : i32
    %21 = arith.addi %2, %c2_i32 : i32
    %22 = arith.index_cast %21 : i32 to index
    %23 = memref.load %arg2[%22] : memref<16xi32, #tpu.memory_space<smem>>
    %24 = arith.index_cast %23 : i32 to index
    %c0_6 = arith.constant 0 : index
    %25 = vector.load %arg3[%24, %c0_6] : memref<512x128xf32, #tpu.memory_space<vmem>>, vector<1x128xf32>
    %c0_7 = arith.constant 0 : index
    %26 = arith.index_cast %c2_i32 : i32 to index
    %c0_8 = arith.constant 0 : index
    %27 = vector.load %arg5[%c0_7, %26, %c0_8] : memref<1x8x128xf32, #tpu.memory_space<vmem>>, vector<1x1x128xf32>
    %28 = vector.shape_cast %27 : vector<1x1x128xf32> to vector<1x128xf32>
    %29 = vector.shape_cast %25 : vector<1x128xf32> to vector<1x1x128xf32>
    tpu.vector_store %arg5[%c0_7, %26, %c0_8], %29 {strides = array<i32>} : memref<1x8x128xf32, #tpu.memory_space<vmem>>, vector<1x1x128xf32>,
    %c3_i32 = arith.constant 3 : i32
    %30 = arith.addi %2, %c3_i32 : i32
    %31 = arith.index_cast %30 : i32 to index
    %32 = memref.load %arg2[%31] : memref<16xi32, #tpu.memory_space<smem>>
    %33 = arith.index_cast %32 : i32 to index
    %c0_9 = arith.constant 0 : index
    %34 = vector.load %arg3[%33, %c0_9] : memref<512x128xf32, #tpu.memory_space<vmem>>, vector<1x128xf32>
    %c0_10 = arith.constant 0 : index
    %35 = arith.index_cast %c3_i32 : i32 to index
    %c0_11 = arith.constant 0 : index
    %36 = vector.load %arg5[%c0_10, %35, %c0_11] : memref<1x8x128xf32, #tpu.memory_space<vmem>>, vector<1x1x128xf32>
    %37 = vector.shape_cast %36 : vector<1x1x128xf32> to vector<1x128xf32>
    %38 = vector.shape_cast %34 : vector<1x128xf32> to vector<1x1x128xf32>
    tpu.vector_store %arg5[%c0_10, %35, %c0_11], %38 {strides = array<i32>} : memref<1x8x128xf32, #tpu.memory_space<vmem>>, vector<1x1x128xf32>,
    %c4_i32 = arith.constant 4 : i32
    %39 = arith.addi %2, %c4_i32 : i32
    %40 = arith.index_cast %39 : i32 to index
    %41 = memref.load %arg2[%40] : memref<16xi32, #tpu.memory_space<smem>>
    %42 = arith.index_cast %41 : i32 to index
    %c0_12 = arith.constant 0 : index
    %43 = vector.load %arg3[%42, %c0_12] : memref<512x128xf32, #tpu.memory_space<vmem>>, vector<1x128xf32>
    %c0_13 = arith.constant 0 : index
    %44 = arith.index_cast %c4_i32 : i32 to index
    %c0_14 = arith.constant 0 : index
    %45 = vector.load %arg5[%c0_13, %44, %c0_14] : memref<1x8x128xf32, #tpu.memory_space<vmem>>, vector<1x1x128xf32>
    %46 = vector.shape_cast %45 : vector<1x1x128xf32> to vector<1x128xf32>
    %47 = vector.shape_cast %43 : vector<1x128xf32> to vector<1x1x128xf32>
    tpu.vector_store %arg5[%c0_13, %44, %c0_14], %47 {strides = array<i32>} : memref<1x8x128xf32, #tpu.memory_space<vmem>>, vector<1x1x128xf32>,
    %c5_i32 = arith.constant 5 : i32
    %48 = arith.addi %2, %c5_i32 : i32
    %49 = arith.index_cast %48 : i32 to index
    %50 = memref.load %arg2[%49] : memref<16xi32, #tpu.memory_space<smem>>
    %51 = arith.index_cast %50 : i32 to index
    %c0_15 = arith.constant 0 : index
    %52 = vector.load %arg3[%51, %c0_15] : memref<512x128xf32, #tpu.memory_space<vmem>>, vector<1x128xf32>
    %c0_16 = arith.constant 0 : index
    %53 = arith.index_cast %c5_i32 : i32 to index
    %c0_17 = arith.constant 0 : index
    %54 = vector.load %arg5[%c0_16, %53, %c0_17] : memref<1x8x128xf32, #tpu.memory_space<vmem>>, vector<1x1x128xf32>
    %55 = vector.shape_cast %54 : vector<1x1x128xf32> to vector<1x128xf32>
    %56 = vector.shape_cast %52 : vector<1x128xf32> to vector<1x1x128xf32>
    tpu.vector_store %arg5[%c0_16, %53, %c0_17], %56 {strides = array<i32>} : memref<1x8x128xf32, #tpu.memory_space<vmem>>, vector<1x1x128xf32>,
    %c6_i32 = arith.constant 6 : i32
    %57 = arith.addi %2, %c6_i32 : i32
    %58 = arith.index_cast %57 : i32 to index
    %59 = memref.load %arg2[%58] : memref<16xi32, #tpu.memory_space<smem>>
    %60 = arith.index_cast %59 : i32 to index
    %c0_18 = arith.constant 0 : index
    %61 = vector.load %arg3[%60, %c0_18] : memref<512x128xf32, #tpu.memory_space<vmem>>, vector<1x128xf32>
    %c0_19 = arith.constant 0 : index
    %62 = arith.index_cast %c6_i32 : i32 to index
    %c0_20 = arith.constant 0 : index
    %63 = vector.load %arg5[%c0_19, %62, %c0_20] : memref<1x8x128xf32, #tpu.memory_space<vmem>>, vector<1x1x128xf32>
    %64 = vector.shape_cast %63 : vector<1x1x128xf32> to vector<1x128xf32>
    %65 = vector.shape_cast %61 : vector<1x128xf32> to vector<1x1x128xf32>
    tpu.vector_store %arg5[%c0_19, %62, %c0_20], %65 {strides = array<i32>} : memref<1x8x128xf32, #tpu.memory_space<vmem>>, vector<1x1x128xf32>,
    %c7_i32 = arith.constant 7 : i32
    %66 = arith.addi %2, %c7_i32 : i32
    %67 = arith.index_cast %66 : i32 to index
    %68 = memref.load %arg2[%67] : memref<16xi32, #tpu.memory_space<smem>>
    %69 = arith.index_cast %68 : i32 to index
    %c0_21 = arith.constant 0 : index
    %70 = vector.load %arg3[%69, %c0_21] : memref<512x128xf32, #tpu.memory_space<vmem>>, vector<1x128xf32>
    %c0_22 = arith.constant 0 : index
    %71 = arith.index_cast %c7_i32 : i32 to index
    %c0_23 = arith.constant 0 : index
    %72 = vector.load %arg5[%c0_22, %71, %c0_23] : memref<1x8x128xf32, #tpu.memory_space<vmem>>, vector<1x1x128xf32>
    %73 = vector.shape_cast %72 : vector<1x1x128xf32> to vector<1x128xf32>
    %74 = vector.shape_cast %70 : vector<1x128xf32> to vector<1x1x128xf32>
    tpu.vector_store %arg5[%c0_22, %71, %c0_23], %74 {strides = array<i32>} : memref<1x8x128xf32, #tpu.memory_space<vmem>>, vector<1x1x128xf32>,
    %c8_i32_24 = arith.constant 8 : i32
    %c0_25 = arith.constant 0 : index
    %c0_26 = arith.constant 0 : index
    %c0_27 = arith.constant 0 : index
    %75 = vector.load %arg5[%c0_25, %c0_26, %c0_27] : memref<1x8x128xf32, #tpu.memory_space<vmem>>, vector<1x8x128xf32>
    %76 = vector.shape_cast %75 : vector<1x8x128xf32> to vector<8x128xf32>
    %c0_28 = arith.constant 0 : index
    %c0_29 = arith.constant 0 : index
    %77 = vector.load %arg4[%c0_28, %c0_29] : memref<8x128xf32, #tpu.memory_space<vmem>>, vector<8x128xf32>
    %78 = arith.addf %76, %77 : vector<8x128xf32>
    %c0_30 = arith.constant 0 : index
    %c0_31 = arith.constant 0 : index
    %c0_32 = arith.constant 0 : index
    %79 = vector.load %arg5[%c0_30, %c0_31, %c0_32] : memref<1x8x128xf32, #tpu.memory_space<vmem>>, vector<1x8x128xf32>
    %80 = vector.shape_cast %79 : vector<1x8x128xf32> to vector<8x128xf32>
    %81 = vector.shape_cast %78 : vector<8x128xf32> to vector<1x8x128xf32>
    tpu.vector_store %arg5[%c0_30, %c0_31, %c0_32], %81 {strides = array<i32>} : memref<1x8x128xf32, #tpu.memory_space<vmem>>, vector<1x8x128xf32>,
    return
  }
  func.func @transform_0(%arg0: i32, %arg1: i32, %arg2: memref<16xi32, #tpu.memory_space<smem>>) -> (i32, i32) {
    %c0_i32 = arith.constant 0 : i32
    %c0_i32_0 = arith.constant 0 : i32
    %c0_i32_1 = arith.constant 0 : i32
    return %c0_i32, %c0_i32_0 : i32, i32
  }
  func.func @transform_1(%arg0: i32, %arg1: i32, %arg2: memref<16xi32, #tpu.memory_space<smem>>) -> (i32, i32) {
    %c0_i32 = arith.constant 0 : i32
    %c0_i32_0 = arith.constant 0 : i32
    return %arg1, %c0_i32 : i32, i32
  }
  func.func @transform_2(%arg0: i32, %arg1: i32, %arg2: memref<16xi32, #tpu.memory_space<smem>>) -> (i32, i32, i32) {
    %c0_i32 = arith.constant 0 : i32
    %c0_i32_0 = arith.constant 0 : i32
    return %arg0, %arg1, %c0_i32 : i32, i32, i32
  }
}

</mosaic_0001>

<llo_original>
// kernel: tpu_custom_call.1
$region0: #{tpu_custom_call.1}
  #allocation0 [shape = 'u32[]', space=smem, size = 0x4, offset = 0x4, fixed_abs, tag = 'smem constant byte address 0x4 - core index']
  #allocation1 [shape = 'u32[144,128]{1,0:T(1,128)}', space=vmem, size = 0x12000, scoped, tag = 'internal scratch']
  #allocation2 [shape = 's32[1]{0}', space=sflag, size = 0x4, scoped, tag = 'scoped memory for tpu_custom_call.1']
  #allocation3 [shape = 'u8[512]{0}', space=smem, size = 0x200, scoped, tag = 'prefetched SMEM operand 0']
  %s0 = inlined_call_operand.hbm [shape: s32[16], index: 0, kind: input, shape index: {}]
  %s1 = inlined_call_operand.hbm [shape: f32[512,128], index: 1, kind: input, shape index: {}]
  %s2 = inlined_call_operand.hbm [shape: f32[8,128], index: 2, kind: input, shape index: {}]
  %s3 = inlined_call_operand.hbm [shape: f32[2,8,128], index: 3, kind: output, shape index: {}]
  %s4 = sld [smem:[#allocation0]]
  $region49: #{tpu_custom_call.1} parent=0
    _
  %s6 = ssub.s32 1, %s4
  %s7 = scalar_select 0, %s6, %s4
  %9 = dma.hbm_to_smem %s0, 16, [#allocation3], [#allocation2]
  %10 = dma.done [#allocation2], 16
  %11 = sfence
  $region1: #{tpu_custom_call.1} parent=0
    #allocation4 [shape = 'u8[262144]{0}', space=vmem, size = 0x40000, scoped, tag = 'input window, operand 1, single buffered']
    #allocation5 [shape = 's32[2]{0}', space=sflag, size = 0x8, scoped, tag = 'scoped memory for tpu_custom_call.1']
    #allocation6 [shape = 's32[2]{0}', space=sflag, size = 0x8, scoped, tag = 'scoped memory for tpu_custom_call.1']
    #allocation7 [shape = 'u8[4096]{0}', space=vmem, size = 0x1000, scoped, tag = 'input window, operand 2, single buffered']
    #allocation8 [shape = 's32[1]{0}', space=sflag, size = 0x4, scoped, tag = 'scoped memory for tpu_custom_call.1']
    #allocation9 [shape = 'u8[8192]{0}', space=vmem, size = 0x2000, scoped, tag = 'output window, operand 0']
    %12 = vsyncpa [#allocation5], 0
    %13 = vsyncpa [#allocation8], 0
    %14 = vsyncpa [#allocation6], 0
    %s15 = scalar_lea.sflag [#allocation6], 1
    %16 = vsyncpa %s15, 0
    loop: start=0, step=1, limit=4
    $region2: #{tpu_custom_call.1} parent=1 // loop_pre_header
      _
    $region3: #{tpu_custom_call.1} parent=1 // loop_header
      %s18 = sphi 0, %s22
      %p19 = scmp.ge.s32.totalorder %s18, 4
      %s25 = sphi 0, %s37
      %s26 = sphi 0, %s33
      %s27 = sphi 0, %s25
      %s28 = sphi 0, %s26
      %s29 = sphi 0, %s27
      %s30 = sphi 0, %s28
      %s38 = sphi 0, %s38
      %s40 = sphi 0, %s38
      %s41 = sphi 0, %s40
      %s55 = sphi 0, %s41
      %s61 = sphi 0, %s63
      %s64 = sphi 0, %s61
      %s65 = sphi 0, %s64
      %s81 = sphi 0, %s65
      %s89 = sphi 0, %s91
      %s92 = sphi 0, %s89
      %s93 = sphi 0, %s92
      %s109 = sphi 0, %s93
    $region4: #{tpu_custom_call.1} parent=1 // loop_header_branch
      %21 = sbr.rel (%p19) target = $region8
    $region5: #{tpu_custom_call.1} parent=1 // loop_body
      %s23 = ssub.s32 %s18, 1
      %s24 = ssub.s32 %s18, 2
      %s31 = sadd.s32 1, %s26
      %p32 = scmp.ge.s32.totalorder %s31, 1
      %s33 = scalar_select %p32, 0, %s31
      %s34 = sadd.s32 1, %s25
      %s35 = scalar_select %p32, %s34, %s25
      %p36 = scmp.ge.s32.totalorder %s35, 2
      %s37 = scalar_select %p36, 0, %s35
      %s39 = sadd.s32 %s38, 1
      %p42 = scmp.eq.s32.totalorder %s18, 1
      %p43 = scmp.ne.s32.totalorder %s38, %s40
      %p44 = scmp.eq.s32.totalorder %s18, 0
      %p45 = por %p43, %p44
      %p46 = scmp.ne.s32.totalorder %s38, %s40
      %p47 = scmp.eq.s32.totalorder %s23, 1
      %p48 = por %p46, %p47
      %p49 = scmp.ne.s32.totalorder %s40, %s41
      %p50 = scmp.eq.s32.totalorder %s23, 0
      %p51 = por %p49, %p50
      %p52 = scmp.ne.s32.totalorder %s40, %s41
      %p53 = scmp.eq.s32.totalorder %s24, 1
      %p54 = por %p52, %p53
      %p56 = scmp.ne.s32.totalorder %s41, %s55
      %p57 = scmp.eq.s32.totalorder %s24, 0
      %p58 = por %p56, %p57
      %s59 = ssub.s32 %s26, %s33
      %p60 = scmp.eq.s32.totalorder %s59, 0
      %s62 = sadd.s32 %s61, 1
      %s63 = scalar_select %p60, %s61, %s62
      %p66 = pneg %p60
      %p67 = scmp.eq.s32.totalorder %s18, 1
      %p68 = por %p66, %p67
      %p69 = scmp.ne.s32.totalorder %s61, %s64
      %p70 = scmp.eq.s32.totalorder %s18, 0
      %p71 = por %p69, %p70
      %p72 = scmp.ne.s32.totalorder %s61, %s64
      %p73 = scmp.eq.s32.totalorder %s23, 1
      %p74 = por %p72, %p73
      %p75 = scmp.ne.s32.totalorder %s64, %s65
      %p76 = scmp.eq.s32.totalorder %s23, 0
      %p77 = por %p75, %p76
      %p78 = scmp.ne.s32.totalorder %s64, %s65
      %p79 = scmp.eq.s32.totalorder %s24, 1
      %p80 = por %p78, %p79
      %p82 = scmp.ne.s32.totalorder %s65, %s81
      %p83 = scmp.eq.s32.totalorder %s24, 0
      %p84 = por %p82, %p83
      %s85 = ssub.s32 %s25, %s37
      %s86 = ssub.s32 %s26, %s33
      %s87 = sor.u32 %s85, %s86
      %p88 = scmp.eq.s32.totalorder %s87, 0
      %s90 = sadd.s32 %s89, 1
      %s91 = scalar_select %p88, %s89, %s90
      %p94 = pneg %p88
      %p95 = scmp.eq.s32.totalorder %s18, 1
      %p96 = por %p94, %p95
      %p97 = scmp.ne.s32.totalorder %s89, %s92
      %p98 = scmp.eq.s32.totalorder %s18, 0
      %p99 = por %p97, %p98
      %p100 = scmp.ne.s32.totalorder %s89, %s92
      %p101 = scmp.eq.s32.totalorder %s23, 1
      %p102 = por %p100, %p101
      %p103 = scmp.ne.s32.totalorder %s92, %s93
      %p104 = scmp.eq.s32.totalorder %s23, 0
      %p105 = por %p103, %p104
      %p106 = scmp.ne.s32.totalorder %s92, %s93
      %p107 = scmp.eq.s32.totalorder %s24, 1
      %p108 = por %p106, %p107
      %p110 = scmp.ne.s32.totalorder %s93, %s109
      %p111 = scmp.eq.s32.totalorder %s24, 0
      %p112 = por %p110, %p111
      %p113 = scmp.le.s32.totalorder 1, %s18
      %p114 = scmp.lt.s32.totalorder %s18, 3
      %p115 = pnand %p113, %p114
      %p116 = pneg %p115
      // Predicated region
      $region9: #{tpu_custom_call.1} parent=5 // pred_check
        _
      $region10: #{tpu_custom_call.1} parent=5 // pred_check_branch
        %118 = sbr.rel (%p115) target = $region12
      $region11: #{tpu_custom_call.1} parent=5 // pred_region
        %s119 = ssub.s32 %s18, 1
        // Predicated region
        $region13: #{tpu_custom_call.1} parent=11 // pred_check
          %p120 = pneg %p51
        $region14: #{tpu_custom_call.1} parent=11 // pred_check_branch
          %122 = sbr.rel (%p120) target = $region16
        $region15: #{tpu_custom_call.1} parent=11 // pred_region
          %s124 = ssub.s32 8192, 8192
          %125 = vsyncadd [#allocation5], %s124
          %s126 = sshll.u32 [#allocation4], 4
          %s127 = int_to_ptr.vmem [resolvable:$true] %s126
          %132 = dma.hbm_to_vmem [thread:$0]  %s1, 8192, %s127, [#allocation5], 128, 128, 8
        $region16: #{tpu_custom_call.1} parent=11 // pred_fallthru
          _
        // Predicated region
        $region17: #{tpu_custom_call.1} parent=11 // pred_check
          %p133 = pneg %p77
        $region18: #{tpu_custom_call.1} parent=11 // pred_check_branch
          %135 = sbr.rel (%p133) target = $region20
        $region19: #{tpu_custom_call.1} parent=11 // pred_region
          %s137 = ssub.s32 128, 128
          %138 = vsyncadd [#allocation8], %s137
          %s139 = smul.addr %s28, 128
          %s140 = scalar_lea.hbm %s2, %s139
          %s142 = sshll.u32 [#allocation7], 4
          %s143 = int_to_ptr.vmem [resolvable:$true] %s142
          %145 = dma.hbm_to_vmem [thread:$0]  %s140, 128, %s143, [#allocation8]
        $region20: #{tpu_custom_call.1} parent=11 // pred_fallthru
          _
      $region12: #{tpu_custom_call.1} parent=5 // pred_fallthru
        _
      %p146 = scmp.lt.s32.totalorder %s18, 2
      // Predicated region
      $region21: #{tpu_custom_call.1} parent=5 // pred_check
        %p147 = pneg %p146
      $region22: #{tpu_custom_call.1} parent=5 // pred_check_branch
        %149 = sbr.rel (%p147) target = $region24
      $region23: #{tpu_custom_call.1} parent=5 // pred_region
        _
      $region24: #{tpu_custom_call.1} parent=5 // pred_fallthru
        _
      %p150 = scmp.le.s32.totalorder 1, %s18
      %p151 = scmp.lt.s32.totalorder %s18, 3
      %p152 = pnand %p150, %p151
      %p153 = pneg %p152
      // Predicated region
      $region25: #{tpu_custom_call.1} parent=5 // pred_check
        _
      $region26: #{tpu_custom_call.1} parent=5 // pred_check_branch
        %155 = sbr.rel (%p152) target = $region28
      $region27: #{tpu_custom_call.1} parent=5 // pred_region
        %s156 = ssub.s32 %s18, 1
        // Predicated region
        $region29: #{tpu_custom_call.1} parent=27 // pred_check
          %p157 = pneg %p51
        $region30: #{tpu_custom_call.1} parent=27 // pred_check_branch
          %159 = sbr.rel (%p157) target = $region32
        $region31: #{tpu_custom_call.1} parent=27 // pred_region
          %160 = dma.done [#allocation5], 8192
        $region32: #{tpu_custom_call.1} parent=27 // pred_fallthru
          _
        // Predicated region
        $region33: #{tpu_custom_call.1} parent=27 // pred_check
          %p161 = pneg %p77
        $region34: #{tpu_custom_call.1} parent=27 // pred_check_branch
          %163 = sbr.rel (%p161) target = $region36
        $region35: #{tpu_custom_call.1} parent=27 // pred_region
          %164 = dma.done [#allocation8], 128
        $region36: #{tpu_custom_call.1} parent=27 // pred_fallthru
          _
        %p165 = pneg %p51
        %p166 = pneg %p48
        %p167 = pneg %p77
        %p168 = pneg %p74
        %p169 = pneg %p105
        %p170 = pneg %p102
        %s171 = sand.u32 %s92, 1
        %s172 = scalar_lea.sflag [#allocation6], %s171
        %s173 = sand.u32 %s92, 1
        %s174 = smul.addr %s173, 8
        %s175 = scalar_lea.vmem [#allocation9], %s174
        %s176 = smul.u32 %s27, 8
        %s177 = smul.u32 %s28, 8
        %s178 = sadd.s32 %s176, %s177
        %s179 = sld [smem:[#allocation3 + %s178]]
        %s180 = scalar_lea.vmem [#allocation4], %s179
        %v181 = vld [vmem:[%s180] sm:$0x1]
        %182 = vst [vmem:[%s175] sm:$0x1] %v181
        %s183 = sadd.s32 %s178, 1
        %s184 = sld [smem:[#allocation3 + %s183]]
        %s185 = scalar_lea.vmem [#allocation4], %s184
        %v186 = vld [vmem:[%s185] sm:$0x1]
        %187 = vst [vmem:[%s175 + $0x1] sm:$0x1] %v186
        %s188 = sadd.s32 %s178, 2
        %s189 = sld [smem:[#allocation3 + %s188]]
        %s190 = scalar_lea.vmem [#allocation4], %s189
        %v191 = vld [vmem:[%s190] sm:$0x1]
        %192 = vst [vmem:[%s175 + $0x2] sm:$0x1] %v191
        %s193 = sadd.s32 %s178, 3
        %s194 = sld [smem:[#allocation3 + %s193]]
        %s195 = scalar_lea.vmem [#allocation4], %s194
        %v196 = vld [vmem:[%s195] sm:$0x1]
        %197 = vst [vmem:[%s175 + $0x3] sm:$0x1] %v196
        %s198 = sadd.s32 %s178, 4
        %s199 = sld [smem:[#allocation3 + %s198]]
        %s200 = scalar_lea.vmem [#allocation4], %s199
        %v201 = vld [vmem:[%s200] sm:$0x1]
        %202 = vst [vmem:[%s175 + $0x4] sm:$0x1] %v201
        %s203 = sadd.s32 %s178, 5
        %s204 = sld [smem:[#allocation3 + %s203]]
        %s205 = scalar_lea.vmem [#allocation4], %s204
        %v206 = vld [vmem:[%s205] sm:$0x1]
        %207 = vst [vmem:[%s175 + $0x5] sm:$0x1] %v206
        %s208 = sadd.s32 %s178, 6
        %s209 = sld [smem:[#allocation3 + %s208]]
        %s210 = scalar_lea.vmem [#allocation4], %s209
        %v211 = vld [vmem:[%s210] sm:$0x1]
        %212 = vst [vmem:[%s175 + $0x6] sm:$0x1] %v211
        %s213 = sadd.s32 %s178, 7
        %s214 = sld [smem:[#allocation3 + %s213]]
        %s215 = scalar_lea.vmem [#allocation4], %s214
        %v216 = vld [vmem:[%s215] sm:$0x1]
        %217 = vst [vmem:[%s175 + $0x7] sm:$0x1] %v216
        %v218 = vld [vmem:[%s175] sm:$0xff]
        %v219 = vld [vmem:[#allocation7] sm:$0xff]
        %v220 = vadd.f32 %v218, %v219
        %221 = vst [vmem:[%s175] sm:$0xff] %v220
        %s222 = sand.u32 %s92, 1
        %s223 = scalar_lea.sflag [#allocation6], %s222
        %s224 = sand.u32 %s92, 1
        %s225 = smul.addr %s224, 8
        %s226 = scalar_lea.vmem [#allocation9], %s225
        // Predicated region
        $region37: #{tpu_custom_call.1} parent=27 // pred_check
          %p227 = pneg %p102
        $region38: #{tpu_custom_call.1} parent=27 // pred_check_branch
          %229 = sbr.rel (%p227) target = $region40
        $region39: #{tpu_custom_call.1} parent=27 // pred_region
          %s231 = ssub.s32 128, 128
          %232 = vsyncadd %s223, %s231
          %s233 = sadd.s32 %s28, %s27
          %s234 = smul.addr %s233, 128
          %s235 = scalar_lea.hbm %s3, %s234
          %s237 = sshll.u32 %s226, 4
          %s238 = int_to_ptr.vmem [resolvable:$true] %s237
          %240 = dma.vmem_to_hbm [thread:$0]  %s238, 128, %s235, %s223
        $region40: #{tpu_custom_call.1} parent=27 // pred_fallthru
          _
      $region28: #{tpu_custom_call.1} parent=5 // pred_fallthru
        _
      %p241 = scmp.le.s32.totalorder 2, %s18
      // Predicated region
      $region41: #{tpu_custom_call.1} parent=5 // pred_check
        %p242 = pneg %p241
      $region42: #{tpu_custom_call.1} parent=5 // pred_check_branch
        %244 = sbr.rel (%p242) target = $region44
      $region43: #{tpu_custom_call.1} parent=5 // pred_region
        %s245 = ssub.s32 %s18, 2
        // Predicated region
        $region45: #{tpu_custom_call.1} parent=43 // pred_check
          %p246 = pneg %p108
        $region46: #{tpu_custom_call.1} parent=43 // pred_check_branch
          %248 = sbr.rel (%p246) target = $region48
        $region47: #{tpu_custom_call.1} parent=43 // pred_region
          %s249 = sand.u32 %s93, 1
          %s250 = scalar_lea.sflag [#allocation6], %s249
          %s251 = sand.u32 %s93, 1
          %s252 = smul.addr %s251, 8
          %s253 = scalar_lea.vmem [#allocation9], %s252
          %254 = dma.done %s250, 128
        $region48: #{tpu_custom_call.1} parent=43 // pred_fallthru
          _
      $region44: #{tpu_custom_call.1} parent=5 // pred_fallthru
        _
    $region6: #{tpu_custom_call.1} parent=1 // loop_footer
      %s22 = sadd.s32 1, %s18
    $region7: #{tpu_custom_call.1} parent=1 // loop_footer_branch
      %17 = sbr.rel target = $region3
    $region8: #{tpu_custom_call.1} parent=1 // loop_exit
      _
    %255 = vsyncpa [#allocation5], 1
    %s256 = scalar_lea.sflag [#allocation5], 1
    %257 = vsyncpa %s256, 1
    %258 = vsyncpa [#allocation8], 1
    %259 = vsyncpa [#allocation6], 1
    %s260 = scalar_lea.sflag [#allocation6], 1
    %261 = vsyncpa %s260, 1

</llo_original>
